<compile_context>
chip_gen: v7x
topology: tpu7x:2x2x1
jax: 0.10.0
libtpu: 0.0.40
codegen_flags: <defaults>
</compile_context>

<pallas_src>
import math

import jax
import jax.numpy as jnp
import numpy as np
from jax.experimental import pallas as pl
from jax.experimental.pallas import tpu as pltpu

_LN_EPS = 1e-5


# ----------------------------------------------------------------------------
# Hardware / tiling helpers
# ----------------------------------------------------------------------------

def _tpu_vmem_and_cores():
    """(vmem_capacity_bytes, is_two_tensorcore_chip) with safe fallbacks."""
    kind = ""
    try:
        kind = jax.devices()[0].device_kind.lower()
    except Exception:  # pragma: no cover - defensive
        pass
    two_tc = "v7" in kind
    cap = None
    try:
        cap = int(pltpu.get_tpu_info().vmem_capacity_bytes)
    except Exception:  # pragma: no cover - defensive
        cap = None
    if cap is None:
        cap = 64 * (1 << 20) if two_tc else 128 * (1 << 20)
    return cap, two_tc


def _choose_row_tile(m, per_row_io, per_row_tmp, resident_bytes, vmem_cap, two_tc):
    """Largest row tile whose working set fits a VMEM budget.

    Budget = ~55% of physical VMEM minus resident (weight/bias) blocks.
    Inputs/outputs are counted double-buffered, in-kernel f32 temporaries once.
    Candidates are multiples of 16 (bf16 sublane packing); multiples of the
    MXU tile height (256 on 2-TC chips, else 128) are preferred, and ">= 2 grid
    blocks" is only preferred on 2-TC chips (megacore sharding).
    """
    budget = max(int(vmem_cap * 0.55) - resident_bytes, 1 << 20)
    denom = 2 * per_row_io + per_row_tmp
    max_rows = max(budget // denom, 8)
    mxu_rows = 256 if two_tc else 128

    cands = [t for t in (2048, 1024, 768, 512, 384, 256, 128, 64, 32, 16)
             if t <= max_rows]

    def score(t):
        return (t % mxu_rows == 0, (not two_tc) or (m // t >= 2), t)

    exact = [t for t in cands if m % t == 0]
    if exact:
        return max(exact, key=score)
    if m <= max_rows and (not cands or m <= cands[0]):
        return m                       # small ragged m: one full-row block
    if not cands:
        return min(m, 16)              # extreme dims; wrapper pads
    return max(cands, key=score)       # wrapper pads m up to a multiple


# ----------------------------------------------------------------------------
# Kernels
# ----------------------------------------------------------------------------

def _layernorm_f32(x_ref):
    """One-pass LayerNorm (no affine) in f32."""
    x = x_ref[...].astype(jnp.float32)
    dim = x.shape[-1]
    s = jnp.sum(x, axis=-1, keepdims=True)
    s2 = jnp.sum(x * x, axis=-1, keepdims=True)
    mean = s * (1.0 / dim)
    var = jnp.maximum(s2 * (1.0 / dim) - mean * mean, 0.0)
    return (x - mean) * jax.lax.rsqrt(var + _LN_EPS)


def _film_kernel_fused(x_ref, film_ref, w_ref, b_ref, o_ref):
    """dim % 128 == 0: single (tm, fd) @ (fd, 2*dim) matmul, aligned split."""
    h = _layernorm_f32(x_ref)
    dim = h.shape[-1]
    f = film_ref[...].astype(w_ref.dtype)          # cast to bf16 in-kernel
    ss = jnp.dot(f, w_ref[...], preferred_element_type=jnp.float32) + b_ref[...]
    scale = ss[:, :dim]                             # 128-lane-aligned slices
    shift = ss[:, dim:]
    o_ref[...] = (h * scale + shift).astype(o_ref.dtype)


def _film_kernel_split(x_ref, film_ref, ws_ref, wsh_ref, bs_ref, bsh_ref, o_ref):
    """General dim: weights pre-split, no lane-crossing slices in-kernel."""
    h = _layernorm_f32(x_ref)
    f = film_ref[...].astype(ws_ref.dtype)
    scale = jnp.dot(f, ws_ref[...], preferred_element_type=jnp.float32) + bs_ref[...]
    shift = jnp.dot(f, wsh_ref[...], preferred_element_type=jnp.float32) + bsh_ref[...]
    o_ref[...] = (h * scale + shift).astype(o_ref.dtype)


# ----------------------------------------------------------------------------
# Wrapper
# ----------------------------------------------------------------------------

def film_forward(params, x, film, *, compute_dtype=jnp.bfloat16,
                 out_dtype=jnp.float32):
    """Pallas FiLM forward.

    x:    (..., dim)       float32
    film: (..., film_dim)  float32  (same leading dims as x)
    Pass out_dtype=jnp.bfloat16 when downstream allows (halves output HBM bytes).
    """
    w, b = params["wf_w"], params["wf_b"]          # (film_dim, 2*dim), (2*dim,)
    *lead, dim = x.shape
    film_dim = film.shape[-1]
    assert film.shape[:-1] == tuple(lead)
    assert w.shape == (film_dim, 2 * dim) and b.shape == (2 * dim,)
    m = int(np.prod(lead)) if lead else 1

    x2 = x.reshape(m, dim).astype(jnp.float32)
    f2 = film.reshape(m, film_dim).astype(jnp.float32)   # cast to bf16 IN-kernel

    fused = (dim % 128 == 0)
    c_bytes = jnp.dtype(compute_dtype).itemsize
    o_bytes = jnp.dtype(out_dtype).itemsize

    if fused:
        w_c = w.astype(compute_dtype)                      # (fd, 2*dim)
        b2 = b.astype(jnp.float32).reshape(1, 2 * dim)
    else:
        w_scale = w[:, :dim].astype(compute_dtype)         # (fd, dim)
        w_shift = w[:, dim:].astype(compute_dtype)
        b_scale = b[:dim].astype(jnp.float32).reshape(1, dim)
        b_shift = b[dim:].astype(jnp.float32).reshape(1, dim)

    # --- VMEM budgeting (generation-aware) -----------------------------------
    vmem_cap, two_tc = _tpu_vmem_and_cores()
    vmem_limit = max(min(vmem_cap - 8 * (1 << 20), 96 * (1 << 20)), 32 * (1 << 20))

    weight_bytes = film_dim * 2 * dim * c_bytes + 2 * dim * 4
    resident_bytes = 2 * weight_bytes          # conservative: assume 2 buffers
    per_row_io = 4 * dim + 4 * film_dim + o_bytes * dim
    per_row_tmp = 16 * dim + c_bytes * film_dim        # f32 x/h, f32 ss, bf16 f
    tm = _choose_row_tile(m, per_row_io, per_row_tmp, resident_bytes,
                          vmem_cap, two_tc)

    # Ragged M: pad rows up to a multiple of tm (LN of zero rows is finite).
    m_pad = ((m + tm - 1) // tm) * tm
    if m_pad != m:
        x2 = jnp.pad(x2, ((0, m_pad - m), (0, 0)))
        f2 = jnp.pad(f2, ((0, m_pad - m), (0, 0)))

    flops = 2 * m * film_dim * (2 * dim) + 8 * m * dim
    bytes_accessed = (m * dim * 4 + m * film_dim * 4 + weight_bytes
                      + m * dim * o_bytes)
    cost = pl.CostEstimate(flops=flops, transcendentals=m,
                           bytes_accessed=bytes_accessed)

    def _build_and_call(use_invariant_buffering):
        pmode = ({"pipeline_mode": pl.Buffered(1)}
                 if use_invariant_buffering else {})

        def inv_spec(shape):        # grid-invariant (resident) block
            return pl.BlockSpec(shape, lambda i: (0, 0), **pmode)

        def row_spec(last):
            return pl.BlockSpec((tm, last), lambda i: (i, 0))

        if fused:
            kernel = _film_kernel_fused
            in_specs = [row_spec(dim), row_spec(film_dim),
                        inv_spec((film_dim, 2 * dim)), inv_spec((1, 2 * dim))]
            operands = (x2, f2, w_c, b2)
        else:
            kernel = _film_kernel_split
            in_specs = [row_spec(dim), row_spec(film_dim),
                        inv_spec((film_dim, dim)), inv_spec((film_dim, dim)),
                        inv_spec((1, dim)), inv_spec((1, dim))]
            operands = (x2, f2, w_scale, w_shift, b_scale, b_shift)

        return pl.pallas_call(
            kernel,
            out_shape=jax.ShapeDtypeStruct((m_pad, dim), out_dtype),
            grid=(m_pad // tm,),
            in_specs=in_specs,
            out_specs=pl.BlockSpec((tm, dim), lambda i: (i, 0)),
            compiler_params=pltpu.CompilerParams(
                dimension_semantics=("parallel",),
                vmem_limit_bytes=int(vmem_limit)),
            cost_estimate=cost,
        )(*operands)

    try:
        out = _build_and_call(True)
    except Exception:
        # Fallback if single-buffered pipeline_mode is rejected by this jax.
        out = _build_and_call(False)

    out = out[:m]
    return out.reshape(*lead, dim) if lead else out.reshape(dim)


# ----------------------------------------------------------------------------
# Pure-JAX reference (f32 end-to-end) for verification
# ----------------------------------------------------------------------------

def film_reference(params, x, film):
    w, b = params["wf_w"], params["wf_b"]
    dim = x.shape[-1]
    mean = jnp.mean(x, axis=-1, keepdims=True)
    var = jnp.mean(jnp.square(x - mean), axis=-1, keepdims=True)
    h = (x - mean) * jax.lax.rsqrt(var + _LN_EPS)
    ss = film @ w + b
    scale, shift = ss[..., :dim], ss[..., dim:]
    return h * scale + shift


# ----------------------------------------------------------------------------
# Params (PyTorch nn.Linear default init, stored transposed: (film_dim, 2*dim))
# ----------------------------------------------------------------------------

def init_params(key, dim, film_dim=None):
    film_dim = film_dim or dim
    kw, kb = jax.random.split(key)
    bound = 1.0 / math.sqrt(film_dim)
    w = jax.random.uniform(kw, (film_dim, 2 * dim), jnp.float32, -bound, bound)
    b = jax.random.uniform(kb, (2 * dim,), jnp.float32, -bound, bound)
    return {"wf_w": w, "wf_b": b}


# ----------------------------------------------------------------------------
# Example run
# ----------------------------------------------------------------------------

if __name__ == "__main__":
    key = jax.random.PRNGKey(0)

    # Case 1: lane-dense shape (dim % 128 == 0) -> fused single-matmul path.
    B, S, DIM, FILM_DIM = 2, 8, 128, 128
    kp, kx, kf, key = jax.random.split(key, 4)
    params = init_params(kp, DIM, FILM_DIM)
    x = jax.random.normal(kx, (B, S, DIM), jnp.float32)
    film = jax.random.normal(kf, (B, S, FILM_DIM), jnp.float32)
    out = jax.block_until_ready(film_forward(params, x, film))
    assert out.shape == (B, S, DIM)
    ref = jax.block_until_ready(film_reference(params, x, film))
    np.testing.assert_allclose(np.asarray(out), np.asarray(ref),
                               rtol=2e-2, atol=2e-2)

    # Case 2: small dim (< 128) -> split-weight path (lane padding, demo only).
    B2, S2, DIM2, FILM_DIM2 = 2, 8, 32, 64
    kp2, kx2, kf2, key = jax.random.split(key, 4)
    params_s = init_params(kp2, DIM2, FILM_DIM2)
    x_s = jax.random.normal(kx2, (B2, S2, DIM2), jnp.float32)
    film_s = jax.random.normal(kf2, (B2, S2, FILM_DIM2), jnp.float32)
    out_s = jax.block_until_ready(film_forward(params_s, x_s, film_s))
    assert out_s.shape == (B2, S2, DIM2)
    ref_s = jax.block_until_ready(film_reference(params_s, x_s, film_s))
    np.testing.assert_allclose(np.asarray(out_s), np.asarray(ref_s),
                               rtol=2e-2, atol=2e-2)

    print("KERNEL_OK")
</pallas_src>

<mosaic_0001>
module attributes {stable_mosaic.version = 11 : i64} {
  func.func @_film_kernel_fused(%arg0: i32, %arg1: memref<16x128xf32, #tpu.memory_space<vmem>>, %arg2: memref<16x128xf32, #tpu.memory_space<vmem>>, %arg3: memref<128x256xbf16, #tpu.memory_space<vmem>>, %arg4: memref<1x256xf32, #tpu.memory_space<vmem>>, %arg5: memref<16x128xf32, #tpu.memory_space<vmem>>) attributes {dimension_semantics = [#tpu.dimension_semantics<parallel>], iteration_bounds = array<i64: 1>, scalar_prefetch = 0 : i64, scratch_operands = 0 : i64, tpu.core_type = #tpu.core_type<tc>, window_params = [{transform_indices = @transform_0, window_bounds = array<i64: 16, 128>}, {transform_indices = @transform_1, window_bounds = array<i64: 16, 128>}, {pipeline_mode = #tpu.pipeline_mode<synchronous>, transform_indices = @transform_2, window_bounds = array<i64: 128, 256>}, {pipeline_mode = #tpu.pipeline_mode<synchronous>, transform_indices = @transform_3, window_bounds = array<i64: 1, 256>}, {transform_indices = @transform_4, window_bounds = array<i64: 16, 128>}]} {
    %c0 = arith.constant 0 : index
    %c0_0 = arith.constant 0 : index
    %0 = vector.load %arg1[%c0, %c0_0] : memref<16x128xf32, #tpu.memory_space<vmem>>, vector<16x128xf32>
    %cst = arith.constant dense<0.000000e+00> : vector<16xf32>
    %1 = vector.multi_reduction <add>, %0, %cst [1] : vector<16x128xf32> to vector<16xf32>
    %2 = vector.shape_cast %1 : vector<16xf32> to vector<16x1xf32>
    %3 = arith.mulf %0, %0 : vector<16x128xf32>
    %cst_1 = arith.constant dense<0.000000e+00> : vector<16xf32>
    %4 = vector.multi_reduction <add>, %3, %cst_1 [1] : vector<16x128xf32> to vector<16xf32>
    %5 = vector.shape_cast %4 : vector<16xf32> to vector<16x1xf32>
    %cst_2 = arith.constant 7.812500e-03 : f32
    %6 = vector.broadcast %cst_2 : f32 to vector<16x1xf32>
    %7 = arith.mulf %2, %6 : vector<16x1xf32>
    %cst_3 = arith.constant 7.812500e-03 : f32
    %8 = vector.broadcast %cst_3 : f32 to vector<16x1xf32>
    %9 = arith.mulf %5, %8 : vector<16x1xf32>
    %10 = arith.mulf %7, %7 : vector<16x1xf32>
    %11 = arith.subf %9, %10 : vector<16x1xf32>
    %cst_4 = arith.constant 0.000000e+00 : f32
    %12 = vector.broadcast %cst_4 : f32 to vector<16x1xf32>
    %13 = arith.maximumf %11, %12 : vector<16x1xf32>
    %14 = vector.broadcast %7 : vector<16x1xf32> to vector<16x128xf32>
    %15 = arith.subf %0, %14 : vector<16x128xf32>
    %cst_5 = arith.constant 9.99999974E-6 : f32
    %16 = vector.broadcast %cst_5 : f32 to vector<16x1xf32>
    %17 = arith.addf %13, %16 : vector<16x1xf32>
    %18 = math.rsqrt %17 : vector<16x1xf32>
    %19 = vector.broadcast %18 : vector<16x1xf32> to vector<16x128xf32>
    %20 = arith.mulf %15, %19 : vector<16x128xf32>
    %c0_6 = arith.constant 0 : index
    %c0_7 = arith.constant 0 : index
    %21 = vector.load %arg2[%c0_6, %c0_7] : memref<16x128xf32, #tpu.memory_space<vmem>>, vector<16x128xf32>
    %22 = arith.truncf %21 : vector<16x128xf32> to vector<16x128xbf16>
    %c0_8 = arith.constant 0 : index
    %c0_9 = arith.constant 0 : index
    %23 = vector.load %arg3[%c0_8, %c0_9] : memref<128x256xbf16, #tpu.memory_space<vmem>>, vector<128x256xbf16>
    %cst_10 = arith.constant dense<0.000000e+00> : vector<16x256xf32>
    %24 = tpu.matmul %22, %23, %cst_10 {dimension_numbers = #tpu.dot_dimension_numbers<[1], [0], [0], [1], [0, 0, 1, 1], [], []>} : vector<16x128xbf16>, vector<128x256xbf16>, vector<16x256xf32> -> vector<16x256xf32>
    %c0_11 = arith.constant 0 : index
    %c0_12 = arith.constant 0 : index
    %25 = vector.load %arg4[%c0_11, %c0_12] : memref<1x256xf32, #tpu.memory_space<vmem>>, vector<1x256xf32>
    %26 = vector.broadcast %25 : vector<1x256xf32> to vector<16x256xf32>
    %27 = arith.addf %24, %26 : vector<16x256xf32>
    %28 = vector.extract_strided_slice %27 {offsets = [0, 0], sizes = [16, 128], strides = [1, 1]} : vector<16x256xf32> to vector<16x128xf32>
    %29 = vector.extract_strided_slice %27 {offsets = [0, 128], sizes = [16, 128], strides = [1, 1]} : vector<16x256xf32> to vector<16x128xf32>
    %30 = arith.mulf %20, %28 : vector<16x128xf32>
    %31 = arith.addf %30, %29 : vector<16x128xf32>
    %c0_13 = arith.constant 0 : index
    %c0_14 = arith.constant 0 : index
    %32 = vector.load %arg5[%c0_13, %c0_14] : memref<16x128xf32, #tpu.memory_space<vmem>>, vector<16x128xf32>
    tpu.vector_store %arg5[%c0_13, %c0_14], %31 {strides = array<i32>} : memref<16x128xf32, #tpu.memory_space<vmem>>, vector<16x128xf32>,
    return
  }
  func.func @transform_0(%arg0: i32) -> (i32, i32) {
    %c0_i32 = arith.constant 0 : i32
    %c0_i32_0 = arith.constant 0 : i32
    return %arg0, %c0_i32 : i32, i32
  }
  func.func @transform_1(%arg0: i32) -> (i32, i32) {
    %c0_i32 = arith.constant 0 : i32
    %c0_i32_0 = arith.constant 0 : i32
    return %arg0, %c0_i32 : i32, i32
  }
  func.func @transform_2(%arg0: i32) -> (i32, i32) {
    %c0_i32 = arith.constant 0 : i32
    %c0_i32_0 = arith.constant 0 : i32
    %c0_i32_1 = arith.constant 0 : i32
    return %c0_i32, %c0_i32_0 : i32, i32
  }
  func.func @transform_3(%arg0: i32) -> (i32, i32) {
    %c0_i32 = arith.constant 0 : i32
    %c0_i32_0 = arith.constant 0 : i32
    %c0_i32_1 = arith.constant 0 : i32
    return %c0_i32, %c0_i32_0 : i32, i32
  }
  func.func @transform_4(%arg0: i32) -> (i32, i32) {
    %c0_i32 = arith.constant 0 : i32
    %c0_i32_0 = arith.constant 0 : i32
    return %arg0, %c0_i32 : i32, i32
  }
}

module attributes {stable_mosaic.version = 11 : i64} {
  func.func @_film_kernel_fused(%arg0: i32, %arg1: memref<16x128xf32, #tpu.memory_space<vmem>>, %arg2: memref<16x128xf32, #tpu.memory_space<vmem>>, %arg3: memref<128x256xbf16, #tpu.memory_space<vmem>>, %arg4: memref<1x256xf32, #tpu.memory_space<vmem>>, %arg5: memref<16x128xf32, #tpu.memory_space<vmem>>) attributes {dimension_semantics = [#tpu.dimension_semantics<parallel>], iteration_bounds = array<i64: 1>, scalar_prefetch = 0 : i64, scratch_operands = 0 : i64, tpu.core_type = #tpu.core_type<tc>, window_params = [{transform_indices = @transform_0, window_bounds = array<i64: 16, 128>}, {transform_indices = @transform_1, window_bounds = array<i64: 16, 128>}, {pipeline_mode = #tpu.pipeline_mode<synchronous>, transform_indices = @transform_2, window_bounds = array<i64: 128, 256>}, {pipeline_mode = #tpu.pipeline_mode<synchronous>, transform_indices = @transform_3, window_bounds = array<i64: 1, 256>}, {transform_indices = @transform_4, window_bounds = array<i64: 16, 128>}]} {
    %c0 = arith.constant 0 : index
    %c0_0 = arith.constant 0 : index
    %0 = vector.load %arg1[%c0, %c0_0] : memref<16x128xf32, #tpu.memory_space<vmem>>, vector<16x128xf32>
    %cst = arith.constant dense<0.000000e+00> : vector<16xf32>
    %1 = vector.multi_reduction <add>, %0, %cst [1] : vector<16x128xf32> to vector<16xf32>
    %2 = vector.shape_cast %1 : vector<16xf32> to vector<16x1xf32>
    %3 = arith.mulf %0, %0 : vector<16x128xf32>
    %cst_1 = arith.constant dense<0.000000e+00> : vector<16xf32>
    %4 = vector.multi_reduction <add>, %3, %cst_1 [1] : vector<16x128xf32> to vector<16xf32>
    %5 = vector.shape_cast %4 : vector<16xf32> to vector<16x1xf32>
    %cst_2 = arith.constant 7.812500e-03 : f32
    %6 = vector.broadcast %cst_2 : f32 to vector<16x1xf32>
    %7 = arith.mulf %2, %6 : vector<16x1xf32>
    %cst_3 = arith.constant 7.812500e-03 : f32
    %8 = vector.broadcast %cst_3 : f32 to vector<16x1xf32>
    %9 = arith.mulf %5, %8 : vector<16x1xf32>
    %10 = arith.mulf %7, %7 : vector<16x1xf32>
    %11 = arith.subf %9, %10 : vector<16x1xf32>
    %cst_4 = arith.constant 0.000000e+00 : f32
    %12 = vector.broadcast %cst_4 : f32 to vector<16x1xf32>
    %13 = arith.maximumf %11, %12 : vector<16x1xf32>
    %14 = vector.broadcast %7 : vector<16x1xf32> to vector<16x128xf32>
    %15 = arith.subf %0, %14 : vector<16x128xf32>
    %cst_5 = arith.constant 9.99999974E-6 : f32
    %16 = vector.broadcast %cst_5 : f32 to vector<16x1xf32>
    %17 = arith.addf %13, %16 : vector<16x1xf32>
    %18 = math.rsqrt %17 : vector<16x1xf32>
    %19 = vector.broadcast %18 : vector<16x1xf32> to vector<16x128xf32>
    %20 = arith.mulf %15, %19 : vector<16x128xf32>
    %c0_6 = arith.constant 0 : index
    %c0_7 = arith.constant 0 : index
    %21 = vector.load %arg2[%c0_6, %c0_7] : memref<16x128xf32, #tpu.memory_space<vmem>>, vector<16x128xf32>
    %22 = arith.truncf %21 : vector<16x128xf32> to vector<16x128xbf16>
    %c0_8 = arith.constant 0 : index
    %c0_9 = arith.constant 0 : index
    %23 = vector.load %arg3[%c0_8, %c0_9] : memref<128x256xbf16, #tpu.memory_space<vmem>>, vector<128x256xbf16>
    %cst_10 = arith.constant dense<0.000000e+00> : vector<16x256xf32>
    %24 = tpu.matmul %22, %23, %cst_10 {dimension_numbers = #tpu.dot_dimension_numbers<[1], [0], [0], [1], [0, 0, 1, 1], [], []>} : vector<16x128xbf16>, vector<128x256xbf16>, vector<16x256xf32> -> vector<16x256xf32>
    %c0_11 = arith.constant 0 : index
    %c0_12 = arith.constant 0 : index
    %25 = vector.load %arg4[%c0_11, %c0_12] : memref<1x256xf32, #tpu.memory_space<vmem>>, vector<1x256xf32>
    %26 = vector.broadcast %25 : vector<1x256xf32> to vector<16x256xf32>
    %27 = arith.addf %24, %26 : vector<16x256xf32>
    %28 = vector.extract_strided_slice %27 {offsets = [0, 0], sizes = [16, 128], strides = [1, 1]} : vector<16x256xf32> to vector<16x128xf32>
    %29 = vector.extract_strided_slice %27 {offsets = [0, 128], sizes = [16, 128], strides = [1, 1]} : vector<16x256xf32> to vector<16x128xf32>
    %30 = arith.mulf %20, %28 : vector<16x128xf32>
    %31 = arith.addf %30, %29 : vector<16x128xf32>
    %c0_13 = arith.constant 0 : index
    %c0_14 = arith.constant 0 : index
    %32 = vector.load %arg5[%c0_13, %c0_14] : memref<16x128xf32, #tpu.memory_space<vmem>>, vector<16x128xf32>
    tpu.vector_store %arg5[%c0_13, %c0_14], %31 {strides = array<i32>} : memref<16x128xf32, #tpu.memory_space<vmem>>, vector<16x128xf32>,
    return
  }
  func.func @transform_0(%arg0: i32) -> (i32, i32) {
    %c0_i32 = arith.constant 0 : i32
    %c0_i32_0 = arith.constant 0 : i32
    return %arg0, %c0_i32 : i32, i32
  }
  func.func @transform_1(%arg0: i32) -> (i32, i32) {
    %c0_i32 = arith.constant 0 : i32
    %c0_i32_0 = arith.constant 0 : i32
    return %arg0, %c0_i32 : i32, i32
  }
  func.func @transform_2(%arg0: i32) -> (i32, i32) {
    %c0_i32 = arith.constant 0 : i32
    %c0_i32_0 = arith.constant 0 : i32
    %c0_i32_1 = arith.constant 0 : i32
    return %c0_i32, %c0_i32_0 : i32, i32
  }
  func.func @transform_3(%arg0: i32) -> (i32, i32) {
    %c0_i32 = arith.constant 0 : i32
    %c0_i32_0 = arith.constant 0 : i32
    %c0_i32_1 = arith.constant 0 : i32
    return %c0_i32, %c0_i32_0 : i32, i32
  }
  func.func @transform_4(%arg0: i32) -> (i32, i32) {
    %c0_i32 = arith.constant 0 : i32
    %c0_i32_0 = arith.constant 0 : i32
    return %arg0, %c0_i32 : i32, i32
  }
}

</mosaic_0001>

<llo_original>
// kernel: tpu_custom_call.1
$region0: #{tpu_custom_call.1}
  #allocation0 [shape = 'u32[]', space=smem, size = 0x4, offset = 0x4, fixed_abs, tag = 'smem constant byte address 0x4 - core index']
  #allocation1 [shape = 'u32[144,128]{1,0:T(1,128)}', space=vmem, size = 0x12000, scoped, tag = 'internal scratch']
  %s0 = inlined_call_operand.hbm [shape: f32[16,128], index: 0, kind: input, shape index: {}]
  %s1 = inlined_call_operand.hbm [shape: f32[16,128], index: 1, kind: input, shape index: {}]
  %s2 = inlined_call_operand.hbm [shape: bf16[128,256], index: 2, kind: input, shape index: {}]
  %s3 = inlined_call_operand.hbm [shape: f32[1,256], index: 3, kind: input, shape index: {}]
  %s4 = inlined_call_operand.hbm [shape: f32[16,128], index: 4, kind: output, shape index: {}]
  %s5 = sld [smem:[#allocation0]]
  $region42: #{tpu_custom_call.1} parent=0
    _
  %s7 = ssub.s32 1, %s5
  %s8 = scalar_select 0, %s7, %s5
  $region1: #{tpu_custom_call.1} parent=0
    #allocation2 [shape = 'u8[8192]{0}', space=vmem, size = 0x2000, scoped, tag = 'input window, operand 0, single buffered']
    #allocation3 [shape = 's32[1]{0}', space=sflag, size = 0x4, scoped, tag = 'scoped memory for tpu_custom_call.1']
    #allocation4 [shape = 's32[1]{0}', space=sflag, size = 0x4, scoped, tag = 'scoped memory for tpu_custom_call.1']
    #allocation5 [shape = 'u8[8192]{0}', space=vmem, size = 0x2000, scoped, tag = 'input window, operand 1, single buffered']
    #allocation6 [shape = 's32[1]{0}', space=sflag, size = 0x4, scoped, tag = 'scoped memory for tpu_custom_call.1']
    #allocation7 [shape = 'u8[65536]{0}', space=vmem, size = 0x10000, scoped, tag = 'input window, operand 2, single buffered']
    #allocation8 [shape = 'u8[1024]{0}', space=vmem, size = 0x400, scoped, tag = 'input window, operand 3, single buffered']
    #allocation9 [shape = 's32[1]{0}', space=sflag, size = 0x4, scoped, tag = 'scoped memory for tpu_custom_call.1']
    #allocation10 [shape = 'u8[8192]{0}', space=vmem, size = 0x2000, scoped, tag = 'output window, operand 0, single buffered']
    %9 = vsyncpa [#allocation3], 0
    %10 = vsyncpa [#allocation6], 0
    %11 = vsyncpa [#allocation9], 0
    %12 = vsyncpa [#allocation4], 0
    // Predicated region
    $region2: #{tpu_custom_call.1} parent=1 // pred_check
      _
    $region3: #{tpu_custom_call.1} parent=1 // pred_check_branch
      %14 = sbr.rel (0) target = $region5
    $region4: #{tpu_custom_call.1} parent=1 // pred_region
      %s16 = ssub.s32 256, 256
      %17 = vsyncadd [#allocation3], %s16
      %s18 = sshll.u32 [#allocation2], 4
      %s19 = int_to_ptr.vmem [resolvable:$true] %s18
      %24 = dma.hbm_to_vmem [thread:$0]  %s0, 256, %s19, [#allocation3], 128, 128, 8
    $region5: #{tpu_custom_call.1} parent=1 // pred_fallthru
      _
    // Predicated region
    $region6: #{tpu_custom_call.1} parent=1 // pred_check
      _
    $region7: #{tpu_custom_call.1} parent=1 // pred_check_branch
      %26 = sbr.rel (0) target = $region9
    $region8: #{tpu_custom_call.1} parent=1 // pred_region
      %s28 = ssub.s32 256, 256
      %29 = vsyncadd [#allocation6], %s28
      %s30 = sshll.u32 [#allocation5], 4
      %s31 = int_to_ptr.vmem [resolvable:$true] %s30
      %36 = dma.hbm_to_vmem [thread:$0]  %s1, 256, %s31, [#allocation6], 128, 128, 8
    $region9: #{tpu_custom_call.1} parent=1 // pred_fallthru
      _
    // Predicated region
    $region10: #{tpu_custom_call.1} parent=1 // pred_check
      _
    $region11: #{tpu_custom_call.1} parent=1 // pred_check_branch
      %38 = sbr.rel (0) target = $region13
    $region12: #{tpu_custom_call.1} parent=1 // pred_region
      %s40 = ssub.s32 2048, 2048
      %41 = vsyncadd [#allocation6], %s40
      %s42 = sshll.u32 [#allocation7], 4
      %s43 = int_to_ptr.vmem [resolvable:$true] %s42
      %48 = dma.hbm_to_vmem [thread:$0]  %s2, 2048, %s43, [#allocation6], 128, 128, 8
    $region13: #{tpu_custom_call.1} parent=1 // pred_fallthru
      _
    // Predicated region
    $region14: #{tpu_custom_call.1} parent=1 // pred_check
      _
    $region15: #{tpu_custom_call.1} parent=1 // pred_check_branch
      %50 = sbr.rel (0) target = $region17
    $region16: #{tpu_custom_call.1} parent=1 // pred_region
      %s52 = ssub.s32 32, 32
      %53 = vsyncadd [#allocation9], %s52
      %s55 = sshll.u32 [#allocation8], 4
      %s56 = int_to_ptr.vmem [resolvable:$true] %s55
      %58 = dma.hbm_to_vmem [thread:$0]  %s3, 32, %s56, [#allocation9]
    $region17: #{tpu_custom_call.1} parent=1 // pred_fallthru
      _
    // Predicated region
    $region18: #{tpu_custom_call.1} parent=1 // pred_check
      _
    $region19: #{tpu_custom_call.1} parent=1 // pred_check_branch
      %60 = sbr.rel (0) target = $region21
    $region20: #{tpu_custom_call.1} parent=1 // pred_region
      %61 = dma.done [#allocation3], 256
    $region21: #{tpu_custom_call.1} parent=1 // pred_fallthru
      _
    // Predicated region
    $region22: #{tpu_custom_call.1} parent=1 // pred_check
      _
    $region23: #{tpu_custom_call.1} parent=1 // pred_check_branch
      %63 = sbr.rel (0) target = $region25
    $region24: #{tpu_custom_call.1} parent=1 // pred_region
      %64 = dma.done [#allocation6], 256
    $region25: #{tpu_custom_call.1} parent=1 // pred_fallthru
      _
    // Predicated region
    $region26: #{tpu_custom_call.1} parent=1 // pred_check
      _
    $region27: #{tpu_custom_call.1} parent=1 // pred_check_branch
      %66 = sbr.rel (0) target = $region29
    $region28: #{tpu_custom_call.1} parent=1 // pred_region
      %67 = dma.done [#allocation6], 2048
    $region29: #{tpu_custom_call.1} parent=1 // pred_fallthru
      _
    // Predicated region
    $region30: #{tpu_custom_call.1} parent=1 // pred_check
      _
    $region31: #{tpu_custom_call.1} parent=1 // pred_check_branch
      %69 = sbr.rel (0) target = $region33
    $region32: #{tpu_custom_call.1} parent=1 // pred_region
      %70 = dma.done [#allocation9], 32
    $region33: #{tpu_custom_call.1} parent=1 // pred_fallthru
      _
    %v72 = vld [vmem:[#allocation2] sm:$0xff]
    %v73 = vld [vmem:[#allocation2 + $0x8] sm:$0xff]
    %74 = vadd.xlane.f32.xlu0 %v72
    %v75 = vpop.xlane.xlu0 %74
    %76 = vadd.xlane.f32.xlu0 %v73
    %v77 = vpop.xlane.xlu0 %76
    %v78 = vmul.f32 %v72, %v72
    %v79 = vmul.f32 %v73, %v73
    %80 = vadd.xlane.f32.xlu0 %v78
    %v81 = vpop.xlane.xlu0 %80
    %82 = vadd.xlane.f32.xlu0 %v79
    %v83 = vpop.xlane.xlu0 %82
    %v84 = vmul.f32 %v75, 0.0078125
    %v85 = vmul.f32 %v77, 0.0078125
    %v86 = vmul.f32 %v81, 0.0078125
    %v87 = vmul.f32 %v83, 0.0078125
    %v88 = vmul.f32 %v84, %v84
    %v89 = vmul.f32 %v85, %v85
    %v90 = vsub.f32 %v86, %v88
    %v91 = vsub.f32 %v87, %v89
    %v92 = vmax.f32 %v90, 0.0
    %v93 = vmax.f32 %v91, 0.0
    %v94 = vsub.f32 %v72, %v84
    %v95 = vsub.f32 %v73, %v85
    %v96 = vadd.f32 %v92, 1e-05
    %v97 = vadd.f32 %v93, 1e-05
    %v98 = vrsqrt.pop %v96
    %v99 = vrsqrt.pop %v97
    %v100 = vmul.f32 %v94, %v98
    %v101 = vmul.f32 %v95, %v99
    %v102 = vld [vmem:[#allocation5] sm:$0xff]
    %v103 = vld [vmem:[#allocation5 + $0x8] sm:$0xff]
    %v104 = vpack.c.bf16 %v103, %v102
    %v105 = vld [vmem:[#allocation7] sm:$0xff]
    %v106 = vld [vmem:[#allocation7 + $0x8] sm:$0xff]
    %v107 = vld [vmem:[#allocation7 + $0x10] sm:$0xff]
    %v108 = vld [vmem:[#allocation7 + $0x18] sm:$0xff]
    %v109 = vld [vmem:[#allocation7 + $0x20] sm:$0xff]
    %v110 = vld [vmem:[#allocation7 + $0x28] sm:$0xff]
    %v111 = vld [vmem:[#allocation7 + $0x30] sm:$0xff]
    %v112 = vld [vmem:[#allocation7 + $0x38] sm:$0xff]
    %v113 = vld [vmem:[#allocation7 + $0x40] sm:$0xff]
    %v114 = vld [vmem:[#allocation7 + $0x48] sm:$0xff]
    %v115 = vld [vmem:[#allocation7 + $0x50] sm:$0xff]
    %v116 = vld [vmem:[#allocation7 + $0x58] sm:$0xff]
    %v117 = vld [vmem:[#allocation7 + $0x60] sm:$0xff]
    %v118 = vld [vmem:[#allocation7 + $0x68] sm:$0xff]
    %v119 = vld [vmem:[#allocation7 + $0x70] sm:$0xff]
    %v120 = vld [vmem:[#allocation7 + $0x78] sm:$0xff]
    %v121 = vld [vmem:[#allocation8] sm:$0x3]
    %v123 = vlaneseq
    %v124 = vshrl.u32 %v123, 7
    %v125 = vsub.s32 0, %v124
    %v126 = vrot.slane %v121, %v125
    %v127 = vlaneseq
    %v128 = vshrl.u32 %v127, 7
    %v129 = vsub.s32 1, %v128
    %v130 = vrot.slane %v121, %v129
    %v149 = vunpack.c.l.b16 %v105
    %v150 = vunpack.c.h.b16 %v105
    %v151 = vunpack.c.l.b16 %v106
    %v152 = vunpack.c.h.b16 %v106
    %v153 = vunpack.c.l.b16 %v107
    %v154 = vunpack.c.h.b16 %v107
    %v155 = vunpack.c.l.b16 %v108
    %v156 = vunpack.c.h.b16 %v108
    %v157 = vunpack.c.l.b16 %v109
    %v158 = vunpack.c.h.b16 %v109
    %v159 = vunpack.c.l.b16 %v110
    %v160 = vunpack.c.h.b16 %v110
    %v161 = vunpack.c.l.b16 %v111
    %v162 = vunpack.c.h.b16 %v111
    %v163 = vunpack.c.l.b16 %v112
    %v164 = vunpack.c.h.b16 %v112
    %v165 = vunpack.c.l.b16 %v113
    %v166 = vunpack.c.h.b16 %v113
    %v167 = vunpack.c.l.b16 %v114
    %v168 = vunpack.c.h.b16 %v114
    %v169 = vunpack.c.l.b16 %v115
    %v170 = vunpack.c.h.b16 %v115
    %v171 = vunpack.c.l.b16 %v116
    %v172 = vunpack.c.h.b16 %v116
    %v173 = vunpack.c.l.b16 %v117
    %v174 = vunpack.c.h.b16 %v117
    %v175 = vunpack.c.l.b16 %v118
    %v176 = vunpack.c.h.b16 %v118
    %v177 = vunpack.c.l.b16 %v119
    %v178 = vunpack.c.h.b16 %v119
    %v179 = vunpack.c.l.b16 %v120
    %v180 = vunpack.c.h.b16 %v120
    %v181 = vpack.c.b16 %v151, %v149
    %v182 = vpack.c.b16 %v152, %v150
    %v183 = vpack.c.b16 %v155, %v153
    %v184 = vpack.c.b16 %v156, %v154
    %v185 = vpack.c.b16 %v159, %v157
    %v186 = vpack.c.b16 %v160, %v158
    %v187 = vpack.c.b16 %v163, %v161
    %v188 = vpack.c.b16 %v164, %v162
    %v189 = vpack.c.b16 %v167, %v165
    %v190 = vpack.c.b16 %v168, %v166
    %v191 = vpack.c.b16 %v171, %v169
    %v192 = vpack.c.b16 %v172, %v170
    %v193 = vpack.c.b16 %v175, %v173
    %v194 = vpack.c.b16 %v176, %v174
    %v195 = vpack.c.b16 %v179, %v177
    %v196 = vpack.c.b16 %v180, %v178
    %213 = vmatprep.subr.bf16.mxu0 %v182
    %214 = vmatpush1.bf16.msra.mxu0 %v181
    %215 = vmatprep.subr.bf16.mxu0 %v184
    %216 = vmatpush1.bf16.msra.mxu0 %v183
    %217 = vmatprep.subr.bf16.mxu0 %v186
    %218 = vmatpush1.bf16.msra.mxu0 %v185
    %219 = vmatprep.subr.bf16.mxu0 %v188
    %220 = vmatpush1.bf16.msra.mxu0 %v187
    %221 = vmatprep.subr.bf16.mxu0 %v190
    %222 = vmatpush1.bf16.msra.mxu0 %v189
    %223 = vmatprep.subr.bf16.mxu0 %v192
    %224 = vmatpush1.bf16.msra.mxu0 %v191
    %225 = vmatprep.subr.bf16.mxu0 %v194
    %226 = vmatpush1.bf16.msra.mxu0 %v193
    %227 = vmatprep.subr.bf16.mxu0 %v196
    %228 = vmatpush1.bf16.msra.mxu0 %v195
    %229 = vmatprep.subr.bf16.mxu0 0
    %230 = vmatpush1.bf16.msra.mxu0 0
    %231 = vmatprep.subr.bf16.mxu0 0
    %232 = vmatpush1.bf16.msra.mxu0 0
    %233 = vmatprep.subr.bf16.mxu0 0
    %234 = vmatpush1.bf16.msra.mxu0 0
    %235 = vmatprep.subr.bf16.mxu0 0
    %236 = vmatpush1.bf16.msra.mxu0 0
    %237 = vmatprep.subr.bf16.mxu0 0
    %238 = vmatpush1.bf16.msra.mxu0 0
    %239 = vmatprep.subr.bf16.mxu0 0
    %240 = vmatpush1.bf16.msra.mxu0 0
    %241 = vmatprep.subr.bf16.mxu0 0
    %242 = vmatpush1.bf16.msra.mxu0 0
    %243 = vmatprep.subr.bf16.mxu0 0
    %244 = vmatpush1.bf16.msra.mxu0 0
    %245 = vmatprep.mubr.bf16.mxu0 0
    %246 = vmatmul.mubr.bf16.gmra.mrb[0].mxu0 %v104
    %v247 = vpop.f32.mrb[0].mxu0
    %v248 = vadd.f32 %v126, %v247
    %v249 = vpop.f32.mrb[0].mxu0
    %v250 = vadd.f32 %v130, %v249
    %v251 = vpop.f32.mrb[0].mxu0
    %v252 = vadd.f32 %v126, %v251
    %v253 = vpop.f32.mrb[0].mxu0
    %v254 = vadd.f32 %v130, %v253
    %255 = vdwg.mxu0
    %v256 = vmul.f32 %v100, %v248
    %v257 = vmul.f32 %v101, %v252
    %v258 = vadd.f32 %v256, %v250
    %v259 = vadd.f32 %v257, %v254
    %260 = vst [vmem:[#allocation10] sm:$0xff] %v258
    %261 = vst [vmem:[#allocation10 + $0x8] sm:$0xff] %v259
    // Predicated region
    $region34: #{tpu_custom_call.1} parent=1 // pred_check
      _
    $region35: #{tpu_custom_call.1} parent=1 // pred_check_branch
      %263 = sbr.rel (0) target = $region37
    $region36: #{tpu_custom_call.1} parent=1 // pred_region
      %s265 = ssub.s32 256, 256
      %266 = vsyncadd [#allocation4], %s265
      %s267 = sshll.u32 [#allocation10], 4
      %s268 = int_to_ptr.vmem [resolvable:$true] %s267
      %273 = dma.vmem_to_hbm [thread:$0]  %s268, 256, %s4, [#allocation4], 128, 128, 8
    $region37: #{tpu_custom_call.1} parent=1 // pred_fallthru
      _
    // Predicated region
    $region38: #{tpu_custom_call.1} parent=1 // pred_check
      _
    $region39: #{tpu_custom_call.1} parent=1 // pred_check_branch
      %275 = sbr.rel (0) target = $region41
    $region40: #{tpu_custom_call.1} parent=1 // pred_region
      %276 = dma.done [#allocation4], 256
    $region41: #{tpu_custom_call.1} parent=1 // pred_fallthru
      _
    %277 = vsyncpa [#allocation3], 1
    %278 = vsyncpa [#allocation6], 1
    %279 = vsyncpa [#allocation9], 1
    %280 = vsyncpa [#allocation4], 1

// kernel: tpu_custom_call.1
$region0: #{tpu_custom_call.1}
  #allocation0 [shape = 'u32[]', space=smem, size = 0x4, offset = 0x4, fixed_abs, tag = 'smem constant byte address 0x4 - core index']
  #allocation1 [shape = 'u32[144,128]{1,0:T(1,128)}', space=vmem, size = 0x12000, scoped, tag = 'internal scratch']
  %s0 = inlined_call_operand.hbm [shape: f32[16,128], index: 0, kind: input, shape index: {}]
  %s1 = inlined_call_operand.hbm [shape: f32[16,128], index: 1, kind: input, shape index: {}]
  %s2 = inlined_call_operand.hbm [shape: bf16[128,256], index: 2, kind: input, shape index: {}]
  %s3 = inlined_call_operand.hbm [shape: f32[1,256], index: 3, kind: input, shape index: {}]
  %s4 = inlined_call_operand.hbm [shape: f32[16,128], index: 4, kind: output, shape index: {}]
  %s5 = sld [smem:[#allocation0]]
  $region42: #{tpu_custom_call.1} parent=0
    _
  %s7 = ssub.s32 1, %s5
  %s8 = scalar_select 0, %s7, %s5
  $region1: #{tpu_custom_call.1} parent=0
    #allocation2 [shape = 'u8[8192]{0}', space=vmem, size = 0x2000, scoped, tag = 'input window, operand 0, single buffered']
    #allocation3 [shape = 's32[1]{0}', space=sflag, size = 0x4, scoped, tag = 'scoped memory for tpu_custom_call.1']
    #allocation4 [shape = 's32[1]{0}', space=sflag, size = 0x4, scoped, tag = 'scoped memory for tpu_custom_call.1']
    #allocation5 [shape = 'u8[8192]{0}', space=vmem, size = 0x2000, scoped, tag = 'input window, operand 1, single buffered']
    #allocation6 [shape = 's32[1]{0}', space=sflag, size = 0x4, scoped, tag = 'scoped memory for tpu_custom_call.1']
    #allocation7 [shape = 'u8[65536]{0}', space=vmem, size = 0x10000, scoped, tag = 'input window, operand 2, single buffered']
    #allocation8 [shape = 'u8[1024]{0}', space=vmem, size = 0x400, scoped, tag = 'input window, operand 3, single buffered']
    #allocation9 [shape = 's32[1]{0}', space=sflag, size = 0x4, scoped, tag = 'scoped memory for tpu_custom_call.1']
    #allocation10 [shape = 'u8[8192]{0}', space=vmem, size = 0x2000, scoped, tag = 'output window, operand 0, single buffered']
    %9 = vsyncpa [#allocation3], 0
    %10 = vsyncpa [#allocation6], 0
    %11 = vsyncpa [#allocation9], 0
    %12 = vsyncpa [#allocation4], 0
    // Predicated region
    $region2: #{tpu_custom_call.1} parent=1 // pred_check
      _
    $region3: #{tpu_custom_call.1} parent=1 // pred_check_branch
      %14 = sbr.rel (0) target = $region5
    $region4: #{tpu_custom_call.1} parent=1 // pred_region
      %s16 = ssub.s32 256, 256
      %17 = vsyncadd [#allocation3], %s16
      %s18 = sshll.u32 [#allocation2], 4
      %s19 = int_to_ptr.vmem [resolvable:$true] %s18
      %24 = dma.hbm_to_vmem [thread:$0]  %s0, 256, %s19, [#allocation3], 128, 128, 8
    $region5: #{tpu_custom_call.1} parent=1 // pred_fallthru
      _
    // Predicated region
    $region6: #{tpu_custom_call.1} parent=1 // pred_check
      _
    $region7: #{tpu_custom_call.1} parent=1 // pred_check_branch
      %26 = sbr.rel (0) target = $region9
    $region8: #{tpu_custom_call.1} parent=1 // pred_region
      %s28 = ssub.s32 256, 256
      %29 = vsyncadd [#allocation6], %s28
      %s30 = sshll.u32 [#allocation5], 4
      %s31 = int_to_ptr.vmem [resolvable:$true] %s30
      %36 = dma.hbm_to_vmem [thread:$0]  %s1, 256, %s31, [#allocation6], 128, 128, 8
    $region9: #{tpu_custom_call.1} parent=1 // pred_fallthru
      _
    // Predicated region
    $region10: #{tpu_custom_call.1} parent=1 // pred_check
      _
    $region11: #{tpu_custom_call.1} parent=1 // pred_check_branch
      %38 = sbr.rel (0) target = $region13
    $region12: #{tpu_custom_call.1} parent=1 // pred_region
      %s40 = ssub.s32 2048, 2048
      %41 = vsyncadd [#allocation6], %s40
      %s42 = sshll.u32 [#allocation7], 4
      %s43 = int_to_ptr.vmem [resolvable:$true] %s42
      %48 = dma.hbm_to_vmem [thread:$0]  %s2, 2048, %s43, [#allocation6], 128, 128, 8
    $region13: #{tpu_custom_call.1} parent=1 // pred_fallthru
      _
    // Predicated region
    $region14: #{tpu_custom_call.1} parent=1 // pred_check
      _
    $region15: #{tpu_custom_call.1} parent=1 // pred_check_branch
      %50 = sbr.rel (0) target = $region17
    $region16: #{tpu_custom_call.1} parent=1 // pred_region
      %s52 = ssub.s32 32, 32
      %53 = vsyncadd [#allocation9], %s52
      %s55 = sshll.u32 [#allocation8], 4
      %s56 = int_to_ptr.vmem [resolvable:$true] %s55
      %58 = dma.hbm_to_vmem [thread:$0]  %s3, 32, %s56, [#allocation9]
    $region17: #{tpu_custom_call.1} parent=1 // pred_fallthru
      _
    // Predicated region
    $region18: #{tpu_custom_call.1} parent=1 // pred_check
      _
    $region19: #{tpu_custom_call.1} parent=1 // pred_check_branch
      %60 = sbr.rel (0) target = $region21
    $region20: #{tpu_custom_call.1} parent=1 // pred_region
      %61 = dma.done [#allocation3], 256
    $region21: #{tpu_custom_call.1} parent=1 // pred_fallthru
      _
    // Predicated region
    $region22: #{tpu_custom_call.1} parent=1 // pred_check
      _
    $region23: #{tpu_custom_call.1} parent=1 // pred_check_branch
      %63 = sbr.rel (0) target = $region25
    $region24: #{tpu_custom_call.1} parent=1 // pred_region
      %64 = dma.done [#allocation6], 256
    $region25: #{tpu_custom_call.1} parent=1 // pred_fallthru
      _
    // Predicated region
    $region26: #{tpu_custom_call.1} parent=1 // pred_check
      _
    $region27: #{tpu_custom_call.1} parent=1 // pred_check_branch
      %66 = sbr.rel (0) target = $region29
    $region28: #{tpu_custom_call.1} parent=1 // pred_region
      %67 = dma.done [#allocation6], 2048
    $region29: #{tpu_custom_call.1} parent=1 // pred_fallthru
      _
    // Predicated region
    $region30: #{tpu_custom_call.1} parent=1 // pred_check
      _
    $region31: #{tpu_custom_call.1} parent=1 // pred_check_branch
      %69 = sbr.rel (0) target = $region33
    $region32: #{tpu_custom_call.1} parent=1 // pred_region
      %70 = dma.done [#allocation9], 32
    $region33: #{tpu_custom_call.1} parent=1 // pred_fallthru
      _
    %v72 = vld [vmem:[#allocation2] sm:$0xff]
    %v73 = vld [vmem:[#allocation2 + $0x8] sm:$0xff]
    %74 = vadd.xlane.f32.xlu0 %v72
    %v75 = vpop.xlane.xlu0 %74
    %76 = vadd.xlane.f32.xlu0 %v73
    %v77 = vpop.xlane.xlu0 %76
    %v78 = vmul.f32 %v72, %v72
    %v79 = vmul.f32 %v73, %v73
    %80 = vadd.xlane.f32.xlu0 %v78
    %v81 = vpop.xlane.xlu0 %80
    %82 = vadd.xlane.f32.xlu0 %v79
    %v83 = vpop.xlane.xlu0 %82
    %v84 = vmul.f32 %v75, 0.0078125
    %v85 = vmul.f32 %v77, 0.0078125
    %v86 = vmul.f32 %v81, 0.0078125
    %v87 = vmul.f32 %v83, 0.0078125
    %v88 = vmul.f32 %v84, %v84
    %v89 = vmul.f32 %v85, %v85
    %v90 = vsub.f32 %v86, %v88
    %v91 = vsub.f32 %v87, %v89
    %v92 = vmax.f32 %v90, 0.0
    %v93 = vmax.f32 %v91, 0.0
    %v94 = vsub.f32 %v72, %v84
    %v95 = vsub.f32 %v73, %v85
    %v96 = vadd.f32 %v92, 1e-05
    %v97 = vadd.f32 %v93, 1e-05
    %v98 = vrsqrt.pop %v96
    %v99 = vrsqrt.pop %v97
    %v100 = vmul.f32 %v94, %v98
    %v101 = vmul.f32 %v95, %v99
    %v102 = vld [vmem:[#allocation5] sm:$0xff]
    %v103 = vld [vmem:[#allocation5 + $0x8] sm:$0xff]
    %v104 = vpack.c.bf16 %v103, %v102
    %v105 = vld [vmem:[#allocation7] sm:$0xff]
    %v106 = vld [vmem:[#allocation7 + $0x8] sm:$0xff]
    %v107 = vld [vmem:[#allocation7 + $0x10] sm:$0xff]
    %v108 = vld [vmem:[#allocation7 + $0x18] sm:$0xff]
    %v109 = vld [vmem:[#allocation7 + $0x20] sm:$0xff]
    %v110 = vld [vmem:[#allocation7 + $0x28] sm:$0xff]
    %v111 = vld [vmem:[#allocation7 + $0x30] sm:$0xff]
    %v112 = vld [vmem:[#allocation7 + $0x38] sm:$0xff]
    %v113 = vld [vmem:[#allocation7 + $0x40] sm:$0xff]
    %v114 = vld [vmem:[#allocation7 + $0x48] sm:$0xff]
    %v115 = vld [vmem:[#allocation7 + $0x50] sm:$0xff]
    %v116 = vld [vmem:[#allocation7 + $0x58] sm:$0xff]
    %v117 = vld [vmem:[#allocation7 + $0x60] sm:$0xff]
    %v118 = vld [vmem:[#allocation7 + $0x68] sm:$0xff]
    %v119 = vld [vmem:[#allocation7 + $0x70] sm:$0xff]
    %v120 = vld [vmem:[#allocation7 + $0x78] sm:$0xff]
    %v121 = vld [vmem:[#allocation8] sm:$0x3]
    %v123 = vlaneseq
    %v124 = vshrl.u32 %v123, 7
    %v125 = vsub.s32 0, %v124
    %v126 = vrot.slane %v121, %v125
    %v127 = vlaneseq
    %v128 = vshrl.u32 %v127, 7
    %v129 = vsub.s32 1, %v128
    %v130 = vrot.slane %v121, %v129
    %v149 = vunpack.c.l.b16 %v105
    %v150 = vunpack.c.h.b16 %v105
    %v151 = vunpack.c.l.b16 %v106
    %v152 = vunpack.c.h.b16 %v106
    %v153 = vunpack.c.l.b16 %v107
    %v154 = vunpack.c.h.b16 %v107
    %v155 = vunpack.c.l.b16 %v108
    %v156 = vunpack.c.h.b16 %v108
    %v157 = vunpack.c.l.b16 %v109
    %v158 = vunpack.c.h.b16 %v109
    %v159 = vunpack.c.l.b16 %v110
    %v160 = vunpack.c.h.b16 %v110
    %v161 = vunpack.c.l.b16 %v111
    %v162 = vunpack.c.h.b16 %v111
    %v163 = vunpack.c.l.b16 %v112
    %v164 = vunpack.c.h.b16 %v112
    %v165 = vunpack.c.l.b16 %v113
    %v166 = vunpack.c.h.b16 %v113
    %v167 = vunpack.c.l.b16 %v114
    %v168 = vunpack.c.h.b16 %v114
    %v169 = vunpack.c.l.b16 %v115
    %v170 = vunpack.c.h.b16 %v115
    %v171 = vunpack.c.l.b16 %v116
    %v172 = vunpack.c.h.b16 %v116
    %v173 = vunpack.c.l.b16 %v117
    %v174 = vunpack.c.h.b16 %v117
    %v175 = vunpack.c.l.b16 %v118
    %v176 = vunpack.c.h.b16 %v118
    %v177 = vunpack.c.l.b16 %v119
    %v178 = vunpack.c.h.b16 %v119
    %v179 = vunpack.c.l.b16 %v120
    %v180 = vunpack.c.h.b16 %v120
    %v181 = vpack.c.b16 %v151, %v149
    %v182 = vpack.c.b16 %v152, %v150
    %v183 = vpack.c.b16 %v155, %v153
    %v184 = vpack.c.b16 %v156, %v154
    %v185 = vpack.c.b16 %v159, %v157
    %v186 = vpack.c.b16 %v160, %v158
    %v187 = vpack.c.b16 %v163, %v161
    %v188 = vpack.c.b16 %v164, %v162
    %v189 = vpack.c.b16 %v167, %v165
    %v190 = vpack.c.b16 %v168, %v166
    %v191 = vpack.c.b16 %v171, %v169
    %v192 = vpack.c.b16 %v172, %v170
    %v193 = vpack.c.b16 %v175, %v173
    %v194 = vpack.c.b16 %v176, %v174
    %v195 = vpack.c.b16 %v179, %v177
    %v196 = vpack.c.b16 %v180, %v178
    %213 = vmatprep.subr.bf16.mxu0 %v182
    %214 = vmatpush1.bf16.msra.mxu0 %v181
    %215 = vmatprep.subr.bf16.mxu0 %v184
    %216 = vmatpush1.bf16.msra.mxu0 %v183
    %217 = vmatprep.subr.bf16.mxu0 %v186
    %218 = vmatpush1.bf16.msra.mxu0 %v185
    %219 = vmatprep.subr.bf16.mxu0 %v188
    %220 = vmatpush1.bf16.msra.mxu0 %v187
    %221 = vmatprep.subr.bf16.mxu0 %v190
    %222 = vmatpush1.bf16.msra.mxu0 %v189
    %223 = vmatprep.subr.bf16.mxu0 %v192
    %224 = vmatpush1.bf16.msra.mxu0 %v191
    %225 = vmatprep.subr.bf16.mxu0 %v194
    %226 = vmatpush1.bf16.msra.mxu0 %v193
    %227 = vmatprep.subr.bf16.mxu0 %v196
    %228 = vmatpush1.bf16.msra.mxu0 %v195
    %229 = vmatprep.subr.bf16.mxu0 0
    %230 = vmatpush1.bf16.msra.mxu0 0
    %231 = vmatprep.subr.bf16.mxu0 0
    %232 = vmatpush1.bf16.msra.mxu0 0
    %233 = vmatprep.subr.bf16.mxu0 0
    %234 = vmatpush1.bf16.msra.mxu0 0
    %235 = vmatprep.subr.bf16.mxu0 0
    %236 = vmatpush1.bf16.msra.mxu0 0
    %237 = vmatprep.subr.bf16.mxu0 0
    %238 = vmatpush1.bf16.msra.mxu0 0
    %239 = vmatprep.subr.bf16.mxu0 0
    %240 = vmatpush1.bf16.msra.mxu0 0
    %241 = vmatprep.subr.bf16.mxu0 0
    %242 = vmatpush1.bf16.msra.mxu0 0
    %243 = vmatprep.subr.bf16.mxu0 0
    %244 = vmatpush1.bf16.msra.mxu0 0
    %245 = vmatprep.mubr.bf16.mxu0 0
    %246 = vmatmul.mubr.bf16.gmra.mrb[0].mxu0 %v104
    %v247 = vpop.f32.mrb[0].mxu0
    %v248 = vadd.f32 %v126, %v247
    %v249 = vpop.f32.mrb[0].mxu0
    %v250 = vadd.f32 %v130, %v249
    %v251 = vpop.f32.mrb[0].mxu0
    %v252 = vadd.f32 %v126, %v251
    %v253 = vpop.f32.mrb[0].mxu0
    %v254 = vadd.f32 %v130, %v253
    %255 = vdwg.mxu0
    %v256 = vmul.f32 %v100, %v248
    %v257 = vmul.f32 %v101, %v252
    %v258 = vadd.f32 %v256, %v250
    %v259 = vadd.f32 %v257, %v254
    %260 = vst [vmem:[#allocation10] sm:$0xff] %v258
    %261 = vst [vmem:[#allocation10 + $0x8] sm:$0xff] %v259
    // Predicated region
    $region34: #{tpu_custom_call.1} parent=1 // pred_check
      _
    $region35: #{tpu_custom_call.1} parent=1 // pred_check_branch
      %263 = sbr.rel (0) target = $region37
    $region36: #{tpu_custom_call.1} parent=1 // pred_region
      %s265 = ssub.s32 256, 256
      %266 = vsyncadd [#allocation4], %s265
      %s267 = sshll.u32 [#allocation10], 4
      %s268 = int_to_ptr.vmem [resolvable:$true] %s267
      %273 = dma.vmem_to_hbm [thread:$0]  %s268, 256, %s4, [#allocation4], 128, 128, 8
    $region37: #{tpu_custom_call.1} parent=1 // pred_fallthru
      _
    // Predicated region
    $region38: #{tpu_custom_call.1} parent=1 // pred_check
      _
    $region39: #{tpu_custom_call.1} parent=1 // pred_check_branch
      %275 = sbr.rel (0) target = $region41
    $region40: #{tpu_custom_call.1} parent=1 // pred_region
      %276 = dma.done [#allocation4], 256
    $region41: #{tpu_custom_call.1} parent=1 // pred_fallthru
      _
    %277 = vsyncpa [#allocation3], 1
    %278 = vsyncpa [#allocation6], 1
    %279 = vsyncpa [#allocation9], 1
    %280 = vsyncpa [#allocation4], 1

</llo_original>
